<compile_context>
chip_gen: v7x
topology: tpu7x:2x2x1
jax: 0.10.0
libtpu: 0.0.40
codegen_flags: <defaults>
</compile_context>

<pallas_src>
import functools
import math

import jax
import jax.numpy as jnp
from jax.experimental import pallas as pl
from jax.experimental.pallas import tpu as pltpu

_LANES = 128
_EPS = 1e-6


def _dice_partials_kernel(pred_ref, target_ref, out_ref, *,
                          tiles_per_split, valid_rows, needs_mask,
                          use_mxu_fold):
    i = pl.program_id(0)   # core-split axis ("parallel"; 2 TCs on v7x)
    j = pl.program_id(1)   # streaming-tile axis ("arbitrary" reduction)

    @pl.when(j == 0)
    def _init():
        out_ref[...] = jnp.zeros_like(out_ref)

    tile_rows = pred_ref.shape[0]

    p = pred_ref[...].astype(jnp.float32)
    t = target_ref[...].astype(jnp.float32)

    if needs_mask:
        # Logical (un-clamped) tile index: rows past `valid_rows` (garbage from
        # the partial edge block, or a clamped duplicate tile) are zeroed,
        # which is reduction-neutral for all sums.
        tile = i * tiles_per_split + j
        row0 = tile * tile_rows
        row_ids = row0 + jax.lax.broadcasted_iota(
            jnp.int32, (tile_rows, _LANES), 0)
        valid = row_ids < valid_rows
        p = jnp.where(valid, p, 0.0)
        t = jnp.where(valid, t, 0.0)

    inter = p * t          # -> sum(pred * target)
    both = p + t           # -> sum(pred) + sum(target)  (fused denominator)

    if use_mxu_fold:
        # Exact row-partition fold matrix F[s, r] = (r % 8 == s): each input
        # row lands on exactly one sublane of the (8,128) accumulator.  The
        # fold runs on the MXU (f32 accumulation), freeing ~2 VPU ops/element
        # for sub-32-bit input streams; hidden under DMA elsewhere.
        r = jax.lax.broadcasted_iota(jnp.int32, (8, tile_rows), 1)
        s = jax.lax.broadcasted_iota(jnp.int32, (8, tile_rows), 0)
        fold = ((r & 7) == s).astype(jnp.float32)
        out_ref[0, 0, :, :] += jnp.dot(fold, inter,
                                       preferred_element_type=jnp.float32)
        out_ref[0, 1, :, :] += jnp.dot(fold, both,
                                       preferred_element_type=jnp.float32)
    else:
        # Fold the (tile_rows, 128) partials into (8, 128) vreg accumulators
        # with plain VPU adds (no XLU cross-lane work in the steady state).
        n_vregs = tile_rows // 8
        out_ref[0, 0, :, :] += jnp.sum(inter.reshape(n_vregs, 8, _LANES), axis=0)
        out_ref[0, 1, :, :] += jnp.sum(both.reshape(n_vregs, 8, _LANES), axis=0)


def _round_up(x, m):
    return ((x + m - 1) // m) * m


def _sublane_multiple(dtype):
    itemsize = jnp.dtype(dtype).itemsize
    return 8 * max(1, 4 // itemsize)   # f32: 8, bf16: 16, int8/fp8: 32


def _chip_config():
    """Returns (num_tensorcores, per-input block-byte budget, scoped VMEM limit)."""
    try:
        kind = jax.devices()[0].device_kind.lower()
    except Exception:
        kind = ""
    if "7" in kind:                      # v7x: 2 TCs/chip, 64 MiB physical VMEM
        return 2, 4 << 20, 32 << 20
    if "v5" in kind or "v6" in kind:     # v5e/v6e: 1 TC, 128 MiB physical VMEM
        return 1, 8 << 20, 48 << 20
    return 1, 4 << 20, 32 << 20          # unknown/future: conservative (v7x-safe)


def dice_loss(pred, target, *, tile_rows=None):
    """Soft Dice loss:  1 - (2*sum(p*t) + eps) / (sum(p) + sum(t) + eps)."""
    assert pred.shape == target.shape, "pred/target shape mismatch"

    total = math.prod(pred.shape)
    p_flat = pred.reshape(-1)
    t_flat = target.reshape(-1)

    rows = total // _LANES
    tail = total - rows * _LANES

    if rows == 0:
        # Fewer than 128 elements: not worth a kernel launch.
        pf = p_flat.astype(jnp.float32)
        tf = t_flat.astype(jnp.float32)
        inter = jnp.sum(pf * tf)
        denom = jnp.sum(pf + tf)
        return 1.0 - (2.0 * inter + _EPS) / (denom + _EPS)

    num_cores, block_bytes, vmem_limit = _chip_config()

    # Main body: first rows*128 elements viewed as (rows, 128).  When
    # total % 128 == 0 this is a metadata-only reshape (no HBM copy).
    if tail:
        # TODO(synk): XLA may materialize this body slice for misaligned
        # totals; typical NCHW segmentation shapes take the copy-free path.
        body = rows * _LANES
        p2d = p_flat[:body].reshape(rows, _LANES)
        t2d = t_flat[:body].reshape(rows, _LANES)
    else:
        p2d = p_flat.reshape(rows, _LANES)
        t2d = t_flat.reshape(rows, _LANES)

    p_item = jnp.dtype(pred.dtype).itemsize
    t_item = jnp.dtype(target.dtype).itemsize
    itemsize = max(p_item, t_item)
    sub = max(_sublane_multiple(pred.dtype), _sublane_multiple(target.dtype))

    # Per-input streaming block: biggest that fits the chip's VMEM budget.
    budget_rows = tile_rows if tile_rows is not None \
        else block_bytes // (_LANES * itemsize)
    budget_rows = max(sub, min(_round_up(budget_rows, sub),
                               _round_up(rows, sub)))

    # Core split only on multi-TensorCore chips, and only when each core gets
    # at least one sublane-group of rows.
    num_splits = num_cores if (num_cores > 1 and rows >= num_cores * sub) else 1

    # Pick the tile so the tile count divides evenly across the splits: no
    # clamped-duplicate tile / wasted DMA on the split path.
    target_tiles = pl.cdiv(rows, budget_rows)
    tiles_per_split = pl.cdiv(target_tiles, num_splits)
    total_tiles = tiles_per_split * num_splits
    tr = _round_up(pl.cdiv(rows, total_tiles), sub)

    n_row_blocks = pl.cdiv(rows, tr)          # real blocks in the (rows,128) view
    needs_mask = (total_tiles * tr != rows)   # ragged edge / tiny-input overhang

    def in_map(i, j):
        # Defensive clamp: never DMA a block starting past the array end; any
        # overhang rows are masked to zero inside the kernel.
        return (jnp.minimum(i * tiles_per_split + j, n_row_blocks - 1), 0)

    use_mxu_fold = (p_item < 4 or t_item < 4)

    kernel = functools.partial(
        _dice_partials_kernel,
        tiles_per_split=tiles_per_split,
        valid_rows=rows,
        needs_mask=needs_mask,
        use_mxu_fold=use_mxu_fold,
    )

    n_body = rows * _LANES
    cost = pl.CostEstimate(
        flops=3 * n_body,              # mul + add + fold-add per element
        transcendentals=0,
        bytes_accessed=n_body * (p_item + t_item)
                       + num_splits * 2 * 8 * _LANES * 4,
    )

    # TODO(synk): on v7x, confirm with xprof that the leading "parallel" axis
    # really shards across both TensorCores (switch it to pltpu.CORE_PARALLEL
    # if not), and only add pipeline_mode=pl.Buffered(3) to the input
    # BlockSpecs if a profile still shows exposed DMA after the larger tiles.
    partials = pl.pallas_call(
        kernel,
        out_shape=jax.ShapeDtypeStruct((num_splits, 2, 8, _LANES), jnp.float32),
        grid_spec=pltpu.PrefetchScalarGridSpec(
            num_scalar_prefetch=0,
            grid=(num_splits, tiles_per_split),
            in_specs=[
                pl.BlockSpec((tr, _LANES), in_map),
                pl.BlockSpec((tr, _LANES), in_map),
            ],
            out_specs=pl.BlockSpec((1, 2, 8, _LANES),
                                   lambda i, j: (i, 0, 0, 0)),
        ),
        compiler_params=pltpu.CompilerParams(
            dimension_semantics=("parallel", "arbitrary"),
            vmem_limit_bytes=vmem_limit,
        ),
        cost_estimate=cost,
    )(p2d, t2d)

    # Tiny epilogue: collapse (splits, 2, 8, 128) partials and form the loss.
    sums = jnp.sum(partials, axis=(0, 2, 3))
    inter, denom = sums[0], sums[1]

    if tail:
        # <128-element lane remainder reduced wrapper-side (no jnp.pad copy of
        # the whole inputs); static slice touches only `tail` elements.
        pt = p_flat[rows * _LANES:].astype(jnp.float32)
        tt = t_flat[rows * _LANES:].astype(jnp.float32)
        inter = inter + jnp.sum(pt * tt)
        denom = denom + jnp.sum(pt + tt)

    score = (2.0 * inter + _EPS) / (denom + _EPS)
    return 1.0 - score


def dice_loss_ref(pred, target):
    p = pred.reshape(-1).astype(jnp.float32)
    t = target.reshape(-1).astype(jnp.float32)
    inter = jnp.sum(p * t)
    score = (2.0 * inter + _EPS) / (jnp.sum(p) + jnp.sum(t) + _EPS)
    return 1.0 - score


if __name__ == "__main__":
    key = jax.random.PRNGKey(0)
    k_pred, k_tgt = jax.random.split(key)

    # NCHW, matching PyTorch conv-output / binary-mask conventions.
    shape = (2, 1, 16, 16)
    pred = jax.nn.sigmoid(jax.random.normal(k_pred, shape, dtype=jnp.float32))
    target = (jax.random.uniform(k_tgt, shape) > 0.5).astype(jnp.float32)

    loss = jax.block_until_ready(dice_loss(pred, target))
    ref = jax.block_until_ready(dice_loss_ref(pred, target))
    assert jnp.allclose(loss, ref, atol=1e-5, rtol=1e-5), (loss, ref)

    # Multi-tile / ragged-last-tile / (on v7x) core-split path.
    shape2 = (3, 1, 40, 128)   # 15360 elems -> 120 rows
    pred2 = jax.nn.sigmoid(jax.random.normal(k_pred, shape2, dtype=jnp.float32))
    target2 = (jax.random.uniform(k_tgt, shape2) > 0.5).astype(jnp.float32)
    loss2 = jax.block_until_ready(dice_loss(pred2, target2, tile_rows=32))
    ref2 = jax.block_until_ready(dice_loss_ref(pred2, target2))
    assert jnp.allclose(loss2, ref2, atol=1e-5, rtol=1e-5), (loss2, ref2)

    # Lane-misaligned total -> wrapper-side tail reduction (no jnp.pad).
    shape3 = (2, 3, 7, 11)     # 462 elems -> 3 full rows + 78-element tail
    pred3 = jax.nn.sigmoid(jax.random.normal(k_pred, shape3, dtype=jnp.float32))
    target3 = (jax.random.uniform(k_tgt, shape3) > 0.5).astype(jnp.float32)
    loss3 = jax.block_until_ready(dice_loss(pred3, target3))
    ref3 = jax.block_until_ready(dice_loss_ref(pred3, target3))
    assert jnp.allclose(loss3, ref3, atol=1e-5, rtol=1e-5), (loss3, ref3)

    # bf16 inputs -> MXU-fold path (f32 products/accumulation in-kernel).
    shape4 = (2, 2, 32, 64)    # 8192 elems -> 64 rows
    pred4 = jax.nn.sigmoid(
        jax.random.normal(k_pred, shape4, dtype=jnp.float32)).astype(jnp.bfloat16)
    target4 = (jax.random.uniform(k_tgt, shape4) > 0.5).astype(jnp.bfloat16)
    loss4 = jax.block_until_ready(dice_loss(pred4, target4))
    ref4 = jax.block_until_ready(dice_loss_ref(pred4, target4))
    assert jnp.allclose(loss4, ref4, atol=1e-5, rtol=1e-5), (loss4, ref4)

    print("KERNEL_OK")
</pallas_src>

<mosaic_0001>
module attributes {stable_mosaic.version = 11 : i64} {
  func.func @_dice_partials_kernel(%arg0: i32, %arg1: i32, %arg2: memref<8x128xf32, #tpu.memory_space<vmem>>, %arg3: memref<8x128xf32, #tpu.memory_space<vmem>>, %arg4: memref<1x2x8x128xf32, #tpu.memory_space<vmem>>) attributes {dimension_semantics = [#tpu.dimension_semantics<parallel>, #tpu.dimension_semantics<arbitrary>], iteration_bounds = array<i64: 1, 1>, scalar_prefetch = 0 : i64, scratch_operands = 0 : i64, tpu.core_type = #tpu.core_type<tc>, window_params = [{transform_indices = @transform_0, window_bounds = array<i64: 8, 128>}, {transform_indices = @transform_1, window_bounds = array<i64: 8, 128>}, {transform_indices = @transform_2, window_bounds = array<i64: 1, 2, 8, 128>}]} {
    %c0_i32 = arith.constant 0 : i32
    %0 = arith.cmpi eq, %arg1, %c0_i32 : i32
    %1 = arith.extui %0 : i1 to i32
    %c0_i32_0 = arith.constant 0 : i32
    %2 = arith.cmpi ne, %1, %c0_i32_0 : i32
    scf.if %2 {
      %cst_22 = arith.constant 0.000000e+00 : f32
      %35 = vector.broadcast %cst_22 : f32 to vector<1x2x8x128xf32>
      %c0_23 = arith.constant 0 : index
      %c0_24 = arith.constant 0 : index
      %c0_25 = arith.constant 0 : index
      %c0_26 = arith.constant 0 : index
      %36 = vector.load %arg4[%c0_23, %c0_24, %c0_25, %c0_26] : memref<1x2x8x128xf32, #tpu.memory_space<vmem>>, vector<1x2x8x128xf32>
      tpu.vector_store %arg4[%c0_23, %c0_24, %c0_25, %c0_26], %35 {strides = array<i32>} : memref<1x2x8x128xf32, #tpu.memory_space<vmem>>, vector<1x2x8x128xf32>,
    } else {
    }
    %c0 = arith.constant 0 : index
    %c0_1 = arith.constant 0 : index
    %3 = vector.load %arg2[%c0, %c0_1] : memref<8x128xf32, #tpu.memory_space<vmem>>, vector<8x128xf32>
    %c0_2 = arith.constant 0 : index
    %c0_3 = arith.constant 0 : index
    %4 = vector.load %arg3[%c0_2, %c0_3] : memref<8x128xf32, #tpu.memory_space<vmem>>, vector<8x128xf32>
    %c1_i32 = arith.constant 1 : i32
    %5 = arith.muli %arg0, %c1_i32 : i32
    %6 = arith.addi %5, %arg1 : i32
    %c8_i32 = arith.constant 8 : i32
    %7 = arith.muli %6, %c8_i32 : i32
    %8 = tpu.iota {dimensions = array<i32: 0>} : vector<8x128xi32>
    %9 = vector.broadcast %7 : i32 to vector<8x128xi32>
    %10 = arith.addi %9, %8 : vector<8x128xi32>
    %c4_i32 = arith.constant 4 : i32
    %11 = vector.broadcast %c4_i32 : i32 to vector<8x128xi32>
    %12 = arith.cmpi slt, %10, %11 : vector<8x128xi32>
    %cst = arith.constant 0.000000e+00 : f32
    %13 = vector.broadcast %cst : f32 to vector<8x128xf32>
    %14 = arith.select %12, %3, %13 : vector<8x128xi1>, vector<8x128xf32>
    %cst_4 = arith.constant 0.000000e+00 : f32
    %15 = vector.broadcast %cst_4 : f32 to vector<8x128xf32>
    %16 = arith.select %12, %4, %15 : vector<8x128xi1>, vector<8x128xf32>
    %17 = arith.mulf %14, %16 : vector<8x128xf32>
    %18 = arith.addf %14, %16 : vector<8x128xf32>
    %c0_5 = arith.constant 0 : index
    %c0_6 = arith.constant 0 : index
    %c0_7 = arith.constant 0 : index
    %c0_8 = arith.constant 0 : index
    %19 = vector.load %arg4[%c0_5, %c0_6, %c0_7, %c0_8] : memref<1x2x8x128xf32, #tpu.memory_space<vmem>>, vector<1x1x8x128xf32>
    %20 = vector.shape_cast %19 : vector<1x1x8x128xf32> to vector<8x128xf32>
    %21 = vector.shape_cast %17 : vector<8x128xf32> to vector<1x8x128xf32>
    %cst_9 = arith.constant dense<0.000000e+00> : vector<8x128xf32>
    %22 = vector.multi_reduction <add>, %21, %cst_9 [0] : vector<1x8x128xf32> to vector<8x128xf32>
    %23 = arith.addf %20, %22 : vector<8x128xf32>
    %c0_10 = arith.constant 0 : index
    %c0_11 = arith.constant 0 : index
    %c0_12 = arith.constant 0 : index
    %c0_13 = arith.constant 0 : index
    %24 = vector.load %arg4[%c0_10, %c0_11, %c0_12, %c0_13] : memref<1x2x8x128xf32, #tpu.memory_space<vmem>>, vector<1x1x8x128xf32>
    %25 = vector.shape_cast %24 : vector<1x1x8x128xf32> to vector<8x128xf32>
    %26 = vector.shape_cast %23 : vector<8x128xf32> to vector<1x1x8x128xf32>
    tpu.vector_store %arg4[%c0_10, %c0_11, %c0_12, %c0_13], %26 {strides = array<i32>} : memref<1x2x8x128xf32, #tpu.memory_space<vmem>>, vector<1x1x8x128xf32>,
    %c0_14 = arith.constant 0 : index
    %c1 = arith.constant 1 : index
    %c0_15 = arith.constant 0 : index
    %c0_16 = arith.constant 0 : index
    %27 = vector.load %arg4[%c0_14, %c1, %c0_15, %c0_16] : memref<1x2x8x128xf32, #tpu.memory_space<vmem>>, vector<1x1x8x128xf32>
    %28 = vector.shape_cast %27 : vector<1x1x8x128xf32> to vector<8x128xf32>
    %29 = vector.shape_cast %18 : vector<8x128xf32> to vector<1x8x128xf32>
    %cst_17 = arith.constant dense<0.000000e+00> : vector<8x128xf32>
    %30 = vector.multi_reduction <add>, %29, %cst_17 [0] : vector<1x8x128xf32> to vector<8x128xf32>
    %31 = arith.addf %28, %30 : vector<8x128xf32>
    %c0_18 = arith.constant 0 : index
    %c1_19 = arith.constant 1 : index
    %c0_20 = arith.constant 0 : index
    %c0_21 = arith.constant 0 : index
    %32 = vector.load %arg4[%c0_18, %c1_19, %c0_20, %c0_21] : memref<1x2x8x128xf32, #tpu.memory_space<vmem>>, vector<1x1x8x128xf32>
    %33 = vector.shape_cast %32 : vector<1x1x8x128xf32> to vector<8x128xf32>
    %34 = vector.shape_cast %31 : vector<8x128xf32> to vector<1x1x8x128xf32>
    tpu.vector_store %arg4[%c0_18, %c1_19, %c0_20, %c0_21], %34 {strides = array<i32>} : memref<1x2x8x128xf32, #tpu.memory_space<vmem>>, vector<1x1x8x128xf32>,
    return
  }
  func.func @transform_0(%arg0: i32, %arg1: i32) -> (i32, i32) {
    %c1_i32 = arith.constant 1 : i32
    %0 = arith.muli %arg0, %c1_i32 : i32
    %1 = arith.addi %0, %arg1 : i32
    %c0_i32 = arith.constant 0 : i32
    %2 = arith.minsi %1, %c0_i32 : i32
    %c0_i32_0 = arith.constant 0 : i32
    %c0_i32_1 = arith.constant 0 : i32
    return %2, %c0_i32_0 : i32, i32
  }
  func.func @transform_1(%arg0: i32, %arg1: i32) -> (i32, i32) {
    %c1_i32 = arith.constant 1 : i32
    %0 = arith.muli %arg0, %c1_i32 : i32
    %1 = arith.addi %0, %arg1 : i32
    %c0_i32 = arith.constant 0 : i32
    %2 = arith.minsi %1, %c0_i32 : i32
    %c0_i32_0 = arith.constant 0 : i32
    %c0_i32_1 = arith.constant 0 : i32
    return %2, %c0_i32_0 : i32, i32
  }
  func.func @transform_2(%arg0: i32, %arg1: i32) -> (i32, i32, i32, i32) {
    %c0_i32 = arith.constant 0 : i32
    %c0_i32_0 = arith.constant 0 : i32
    %c0_i32_1 = arith.constant 0 : i32
    %c0_i32_2 = arith.constant 0 : i32
    return %arg0, %c0_i32, %c0_i32_0, %c0_i32_1 : i32, i32, i32, i32
  }
}

</mosaic_0001>

<llo_original>
// kernel: tpu_custom_call.1
$region0: #{tpu_custom_call.1}
  #allocation0 [shape = 'u32[]', space=smem, size = 0x4, offset = 0x4, fixed_abs, tag = 'smem constant byte address 0x4 - core index']
  #allocation1 [shape = 'u32[144,128]{1,0:T(1,128)}', space=vmem, size = 0x12000, scoped, tag = 'internal scratch']
  %s0 = inlined_call_operand.hbm [shape: f32[4,128], index: 0, kind: input, shape index: {}]
  %s1 = inlined_call_operand.hbm [shape: f32[4,128], index: 1, kind: input, shape index: {}]
  %s2 = inlined_call_operand.hbm [shape: f32[1,2,8,128], index: 2, kind: output, shape index: {}]
  %s3 = sld [smem:[#allocation0]]
  $region30: #{tpu_custom_call.1} parent=0
    _
  %s5 = ssub.s32 1, %s3
  %s6 = scalar_select 0, %s5, %s3
  $region1: #{tpu_custom_call.1} parent=0
    #allocation2 [shape = 'u8[4096]{0}', space=vmem, size = 0x1000, scoped, tag = 'input window, operand 0, single buffered']
    #allocation3 [shape = 's32[1]{0}', space=sflag, size = 0x4, scoped, tag = 'scoped memory for tpu_custom_call.1']
    #allocation4 [shape = 's32[1]{0}', space=sflag, size = 0x4, scoped, tag = 'scoped memory for tpu_custom_call.1']
    #allocation5 [shape = 'u8[4096]{0}', space=vmem, size = 0x1000, scoped, tag = 'input window, operand 1, single buffered']
    #allocation6 [shape = 's32[1]{0}', space=sflag, size = 0x4, scoped, tag = 'scoped memory for tpu_custom_call.1']
    #allocation7 [shape = 'u8[8192]{0}', space=vmem, size = 0x2000, scoped, tag = 'output window, operand 0, single buffered']
    %7 = vsyncpa [#allocation3], 0
    %8 = vsyncpa [#allocation6], 0
    %9 = vsyncpa [#allocation4], 0
    // Predicated region
    $region2: #{tpu_custom_call.1} parent=1 // pred_check
      _
    $region3: #{tpu_custom_call.1} parent=1 // pred_check_branch
      %11 = sbr.rel (0) target = $region5
    $region4: #{tpu_custom_call.1} parent=1 // pred_region
      %s12 = sadd.s32 0, 0
      %p13 = scmp.lt.s32.totalorder %s12, 0
      %s14 = scalar_select %p13, %s12, 0
      %s15 = smul.u32 2, %s14
      %s16 = ssub.s32 1, %s15
      %s17 = smul.u32 64, %s16
      %s19 = ssub.s32 128, %s17
      %20 = vsyncadd [#allocation3], %s19
      %p21 = scmp.ne.s32.totalorder 0, %s17
      %s22 = smul.addr %s15, 64
      %s23 = scalar_lea.hbm %s0, %s22
      %s24 = smul.u32 4, %s16
      %s25 = sshll.u32 [#allocation2], 4
      %s26 = int_to_ptr.vmem [resolvable:$true] %s25
      %s27 = sshll.u32 %s24, 4
      %31 = dma.hbm_to_vmem [thread:$0]  (%p21), %s23, %s27, %s26, [#allocation3], 64, 64, 4
    $region5: #{tpu_custom_call.1} parent=1 // pred_fallthru
      _
    // Predicated region
    $region6: #{tpu_custom_call.1} parent=1 // pred_check
      _
    $region7: #{tpu_custom_call.1} parent=1 // pred_check_branch
      %33 = sbr.rel (0) target = $region9
    $region8: #{tpu_custom_call.1} parent=1 // pred_region
      %s34 = sadd.s32 0, 0
      %p35 = scmp.lt.s32.totalorder %s34, 0
      %s36 = scalar_select %p35, %s34, 0
      %s37 = smul.u32 2, %s36
      %s38 = ssub.s32 1, %s37
      %s39 = smul.u32 64, %s38
      %s41 = ssub.s32 128, %s39
      %42 = vsyncadd [#allocation6], %s41
      %p43 = scmp.ne.s32.totalorder 0, %s39
      %s44 = smul.addr %s37, 64
      %s45 = scalar_lea.hbm %s1, %s44
      %s46 = smul.u32 4, %s38
      %s47 = sshll.u32 [#allocation5], 4
      %s48 = int_to_ptr.vmem [resolvable:$true] %s47
      %s49 = sshll.u32 %s46, 4
      %53 = dma.hbm_to_vmem [thread:$0]  (%p43), %s45, %s49, %s48, [#allocation6], 64, 64, 4
    $region9: #{tpu_custom_call.1} parent=1 // pred_fallthru
      _
    // Predicated region
    $region10: #{tpu_custom_call.1} parent=1 // pred_check
      _
    $region11: #{tpu_custom_call.1} parent=1 // pred_check_branch
      %55 = sbr.rel (0) target = $region13
    $region12: #{tpu_custom_call.1} parent=1 // pred_region
      %56 = dma.done [#allocation3], 128
    $region13: #{tpu_custom_call.1} parent=1 // pred_fallthru
      _
    // Predicated region
    $region14: #{tpu_custom_call.1} parent=1 // pred_check
      _
    $region15: #{tpu_custom_call.1} parent=1 // pred_check_branch
      %58 = sbr.rel (0) target = $region17
    $region16: #{tpu_custom_call.1} parent=1 // pred_region
      %59 = dma.done [#allocation6], 128
    $region17: #{tpu_custom_call.1} parent=1 // pred_fallthru
      _
    %s60 = sadd.s32 0, 0
    %p61 = scmp.lt.s32.totalorder %s60, 0
    %s62 = scalar_select %p61, %s60, 0
    %s63 = smul.u32 2, %s62
    %s64 = ssub.s32 1, %s63
    %s65 = smul.u32 64, %s64
    %s66 = sadd.s32 0, 0
    %p67 = scmp.lt.s32.totalorder %s66, 0
    %s68 = scalar_select %p67, %s66, 0
    %s69 = smul.u32 2, %s68
    %s70 = ssub.s32 1, %s69
    %s71 = smul.u32 64, %s70
    %p72 = scmp.eq.s32.totalorder 0, 0
    // Predicated region
    $region18: #{tpu_custom_call.1} parent=1 // pred_check
      %p73 = pneg %p72
    $region19: #{tpu_custom_call.1} parent=1 // pred_check_branch
      %75 = sbr.rel (%p73) target = $region21
    $region20: #{tpu_custom_call.1} parent=1 // pred_region
      %76 = vst [vmem:[#allocation7] sm:$0xff] 0.0
      %77 = vst [vmem:[#allocation7 + $0x8] sm:$0xff] 0.0
    $region21: #{tpu_custom_call.1} parent=1 // pred_fallthru
      _
    %v78 = vld [vmem:[#allocation2] sm:$0xff]
    %v79 = vld [vmem:[#allocation5] sm:$0xff]
    %s80 = sadd.s32 0, 0
    %s81 = smul.u32 %s80, 8
    %v82 = vlaneseq
    %v83 = vshrl.u32 %v82, 7
    %v84 = vstv %s81
    %v85 = vadd.s32 %v84, %v83
    %vm86 = vcmp.lt.s32.totalorder %v85, 4
    %v87 = vsel %vm86, %v78, 0.0
    %v88 = vsel %vm86, %v79, 0.0
    %v89 = vmul.f32 %v87, %v88
    %v90 = vadd.f32 %v87, %v88
    %v91 = vld [vmem:[#allocation7] sm:$0xff]
    %v92 = vadd.f32 %v89, 0.0
    %v93 = vadd.f32 %v91, %v92
    %94 = vst [vmem:[#allocation7] sm:$0xff] %v93
    %s95 = scalar_lea.vmem [#allocation7], 8
    %v96 = vld [vmem:[%s95] sm:$0xff]
    %v97 = vadd.f32 %v90, 0.0
    %v98 = vadd.f32 %v96, %v97
    %99 = vst [vmem:[%s95] sm:$0xff] %v98
    // Predicated region
    $region22: #{tpu_custom_call.1} parent=1 // pred_check
      _
    $region23: #{tpu_custom_call.1} parent=1 // pred_check_branch
      %101 = sbr.rel (0) target = $region25
    $region24: #{tpu_custom_call.1} parent=1 // pred_region
      %s103 = ssub.s32 256, 256
      %104 = vsyncadd [#allocation4], %s103
      %s105 = sshll.u32 [#allocation7], 4
      %s106 = int_to_ptr.vmem [resolvable:$true] %s105
      %111 = dma.vmem_to_hbm [thread:$0]  %s106, 256, %s2, [#allocation4], 128, 128, 8
    $region25: #{tpu_custom_call.1} parent=1 // pred_fallthru
      _
    // Predicated region
    $region26: #{tpu_custom_call.1} parent=1 // pred_check
      _
    $region27: #{tpu_custom_call.1} parent=1 // pred_check_branch
      %113 = sbr.rel (0) target = $region29
    $region28: #{tpu_custom_call.1} parent=1 // pred_region
      %114 = dma.done [#allocation4], 256
    $region29: #{tpu_custom_call.1} parent=1 // pred_fallthru
      _
    %115 = vsyncpa [#allocation3], 1
    %116 = vsyncpa [#allocation6], 1
    %117 = vsyncpa [#allocation4], 1

</llo_original>
